<compile_context>
chip_gen: v7x
topology: tpu7x:2x2x1
jax: 0.10.0
libtpu: 0.0.40
codegen_flags: <defaults>
</compile_context>

<pallas_src>
import jax
import jax.numpy as jnp
from jax.experimental import pallas as pl
from jax.experimental.pallas import tpu as pltpu

INPUT_DIM = 100
HIDDEN = 50
OUT_DIM = 1
NEG_SLOPE = 0.01   # F.leaky_relu default
MAX_TILE_B = 512   # batch-tile rows (knee of the measured HBM-roofline curve)


def _leaky_relu(x):
    return jnp.where(x > 0, x, NEG_SLOPE * x)


def g_mlp_kernel(x_ref, w1_ref, b1_ref, w2_ref, b2_ref, w3_ref, b3_ref, o_ref):
    # Cast to bf16 in-kernel (VPU, hidden under the x-tile DMA); accumulate f32.
    xb = x_ref[...].astype(jnp.bfloat16)

    # fc1: (TB,100)bf16 @ (100,50)bf16 -> f32 (MXU, f32 accumulation)
    h1 = jnp.dot(xb, w1_ref[...].astype(jnp.bfloat16),
                 preferred_element_type=jnp.float32)
    h1 = _leaky_relu(h1 + b1_ref[...])                       # f32

    # fc2: (TB,50)bf16 @ (50,50)bf16 -> f32 (MXU)
    h2 = jnp.dot(h1.astype(jnp.bfloat16), w2_ref[...].astype(jnp.bfloat16),
                 preferred_element_type=jnp.float32)
    h2 = _leaky_relu(h2 + b2_ref[...])                       # f32

    # fc3 (out dim = 1): VPU multiply + XLU lane reduce instead of a tiny MXU call.
    out = jnp.sum(h2 * w3_ref[...], axis=-1, keepdims=True) + b3_ref[...]
    o_ref[...] = out.astype(o_ref.dtype)


def g_forward(x, params, *, max_tile_b=MAX_TILE_B):
    """x: (B, 100) float32 -> (B, 1) float32."""
    w1, b1, w2, b2, w3, b3 = params
    B = x.shape[0]

    # Batch tile: multiple of 8, at most max_tile_b; pad B up to a tile multiple.
    b8 = ((B + 7) // 8) * 8
    TB = min(max_tile_b, b8)
    B_pad = ((B + TB - 1) // TB) * TB

    xp = x
    if B_pad != B:
        xp = jnp.pad(x, ((0, B_pad - B), (0, 0)))

    w3r = w3.reshape(1, HIDDEN).astype(jnp.float32)  # (50,1) -> (1,50) row

    grid = (pl.cdiv(B_pad, TB),)

    def const(shape):  # weights/biases: stay resident across the batch grid
        return pl.BlockSpec(shape, lambda i: (0, 0))

    out = pl.pallas_call(
        g_mlp_kernel,
        out_shape=jax.ShapeDtypeStruct((B_pad, OUT_DIM), jnp.float32),
        grid=grid,
        in_specs=[
            pl.BlockSpec((TB, INPUT_DIM), lambda i: (i, 0)),  # x: batch-tiled
            const((INPUT_DIM, HIDDEN)),                       # W1
            const((1, HIDDEN)),                               # b1
            const((HIDDEN, HIDDEN)),                          # W2
            const((1, HIDDEN)),                               # b2
            const((1, HIDDEN)),                               # w3 as row
            const((1, OUT_DIM)),                              # b3
        ],
        out_specs=pl.BlockSpec((TB, OUT_DIM), lambda i: (i, 0)),
        compiler_params=pltpu.CompilerParams(
            dimension_semantics=("parallel",)),
    )(xp, w1, b1, w2, b2, w3r, b3)
    return out[:B]


def init_params(key):
    """Deterministic init mimicking PyTorch's default Linear init
    (uniform +/- 1/sqrt(fan_in)). Weights stored as (in, out)."""
    ks = jax.random.split(key, 6)

    def lin(kw, kb, fan_in, fan_out):
        bound = 1.0 / jnp.sqrt(fan_in)
        w = jax.random.uniform(kw, (fan_in, fan_out), jnp.float32, -bound, bound)
        b = jax.random.uniform(kb, (1, fan_out), jnp.float32, -bound, bound)
        return w, b

    w1, b1 = lin(ks[0], ks[1], INPUT_DIM, HIDDEN)
    w2, b2 = lin(ks[2], ks[3], HIDDEN, HIDDEN)
    w3, b3 = lin(ks[4], ks[5], HIDDEN, OUT_DIM)
    return (w1, b1, w2, b2, w3, b3)


def g_forward_ref(x, params):
    """Pure-JAX reference using the same bf16-input / f32-accum matmuls."""
    w1, b1, w2, b2, w3, b3 = params
    xb = x.astype(jnp.bfloat16)
    h1 = jax.nn.leaky_relu(
        jnp.dot(xb, w1.astype(jnp.bfloat16),
                preferred_element_type=jnp.float32) + b1, NEG_SLOPE)
    h2 = jax.nn.leaky_relu(
        jnp.dot(h1.astype(jnp.bfloat16), w2.astype(jnp.bfloat16),
                preferred_element_type=jnp.float32) + b2, NEG_SLOPE)
    return jnp.sum(h2 * w3.reshape(1, -1), axis=-1, keepdims=True) + b3


if __name__ == "__main__":
    key = jax.random.PRNGKey(0)
    k_x, k_p = jax.random.split(key)
    params = init_params(k_p)

    # Primary check: tile-exact batch.
    batch = 8
    x = jax.random.normal(k_x, (batch, INPUT_DIM), dtype=jnp.float32)
    out = jax.block_until_ready(g_forward(x, params))
    ref = g_forward_ref(x, params)
    assert out.shape == (batch, OUT_DIM)
    assert jnp.allclose(out, ref, atol=1e-3, rtol=1e-3), "mismatch vs JAX reference"

    # Secondary check: batch not a multiple of the tile (exercises padding path).
    out5 = jax.block_until_ready(g_forward(x[:5], params))
    ref5 = g_forward_ref(x[:5], params)
    assert out5.shape == (5, OUT_DIM)
    assert jnp.allclose(out5, ref5, atol=1e-3, rtol=1e-3), "mismatch (padded batch)"

    print("KERNEL_OK")
</pallas_src>

<mosaic_0001>
module attributes {stable_mosaic.version = 11 : i64} {
  func.func @g_mlp_kernel(%arg0: i32, %arg1: memref<8x100xf32, #tpu.memory_space<vmem>>, %arg2: memref<100x50xf32, #tpu.memory_space<vmem>>, %arg3: memref<1x50xf32, #tpu.memory_space<vmem>>, %arg4: memref<50x50xf32, #tpu.memory_space<vmem>>, %arg5: memref<1x50xf32, #tpu.memory_space<vmem>>, %arg6: memref<1x50xf32, #tpu.memory_space<vmem>>, %arg7: memref<1x1xf32, #tpu.memory_space<vmem>>, %arg8: memref<8x1xf32, #tpu.memory_space<vmem>>) attributes {dimension_semantics = [#tpu.dimension_semantics<parallel>], iteration_bounds = array<i64: 1>, scalar_prefetch = 0 : i64, scratch_operands = 0 : i64, tpu.core_type = #tpu.core_type<tc>, window_params = [{transform_indices = @transform_0, window_bounds = array<i64: 8, 100>}, {pipeline_mode = #tpu.pipeline_mode<synchronous>, transform_indices = @transform_1, window_bounds = array<i64: 100, 50>}, {pipeline_mode = #tpu.pipeline_mode<synchronous>, transform_indices = @transform_2, window_bounds = array<i64: 1, 50>}, {pipeline_mode = #tpu.pipeline_mode<synchronous>, transform_indices = @transform_3, window_bounds = array<i64: 50, 50>}, {pipeline_mode = #tpu.pipeline_mode<synchronous>, transform_indices = @transform_4, window_bounds = array<i64: 1, 50>}, {pipeline_mode = #tpu.pipeline_mode<synchronous>, transform_indices = @transform_5, window_bounds = array<i64: 1, 50>}, {pipeline_mode = #tpu.pipeline_mode<synchronous>, transform_indices = @transform_6, window_bounds = array<i64: 1, 1>}, {transform_indices = @transform_7, window_bounds = array<i64: 8, 1>}]} {
    %c0 = arith.constant 0 : index
    %c0_0 = arith.constant 0 : index
    %0 = vector.load %arg1[%c0, %c0_0] : memref<8x100xf32, #tpu.memory_space<vmem>>, vector<8x100xf32>
    %1 = arith.truncf %0 : vector<8x100xf32> to vector<8x100xbf16>
    %c0_1 = arith.constant 0 : index
    %c0_2 = arith.constant 0 : index
    %2 = vector.load %arg2[%c0_1, %c0_2] : memref<100x50xf32, #tpu.memory_space<vmem>>, vector<100x50xf32>
    %3 = arith.truncf %2 : vector<100x50xf32> to vector<100x50xbf16>
    %cst = arith.constant dense<0.000000e+00> : vector<8x50xf32>
    %4 = tpu.matmul %1, %3, %cst {dimension_numbers = #tpu.dot_dimension_numbers<[1], [0], [0], [1], [0, 0, 1, 1], [], []>} : vector<8x100xbf16>, vector<100x50xbf16>, vector<8x50xf32> -> vector<8x50xf32>
    %c0_3 = arith.constant 0 : index
    %c0_4 = arith.constant 0 : index
    %5 = vector.load %arg3[%c0_3, %c0_4] : memref<1x50xf32, #tpu.memory_space<vmem>>, vector<1x50xf32>
    %6 = vector.broadcast %5 : vector<1x50xf32> to vector<8x50xf32>
    %7 = arith.addf %4, %6 : vector<8x50xf32>
    %cst_5 = arith.constant 0.000000e+00 : f32
    %8 = vector.broadcast %cst_5 : f32 to vector<8x50xf32>
    %9 = arith.cmpf ogt, %7, %8 : vector<8x50xf32>
    %cst_6 = arith.constant 0.00999999977 : f32
    %10 = vector.broadcast %cst_6 : f32 to vector<8x50xf32>
    %11 = arith.mulf %10, %7 : vector<8x50xf32>
    %12 = arith.select %9, %7, %11 : vector<8x50xi1>, vector<8x50xf32>
    %13 = arith.truncf %12 : vector<8x50xf32> to vector<8x50xbf16>
    %c0_7 = arith.constant 0 : index
    %c0_8 = arith.constant 0 : index
    %14 = vector.load %arg4[%c0_7, %c0_8] : memref<50x50xf32, #tpu.memory_space<vmem>>, vector<50x50xf32>
    %15 = arith.truncf %14 : vector<50x50xf32> to vector<50x50xbf16>
    %cst_9 = arith.constant dense<0.000000e+00> : vector<8x50xf32>
    %16 = tpu.matmul %13, %15, %cst_9 {dimension_numbers = #tpu.dot_dimension_numbers<[1], [0], [0], [1], [0, 0, 1, 1], [], []>} : vector<8x50xbf16>, vector<50x50xbf16>, vector<8x50xf32> -> vector<8x50xf32>
    %c0_10 = arith.constant 0 : index
    %c0_11 = arith.constant 0 : index
    %17 = vector.load %arg5[%c0_10, %c0_11] : memref<1x50xf32, #tpu.memory_space<vmem>>, vector<1x50xf32>
    %18 = vector.broadcast %17 : vector<1x50xf32> to vector<8x50xf32>
    %19 = arith.addf %16, %18 : vector<8x50xf32>
    %cst_12 = arith.constant 0.000000e+00 : f32
    %20 = vector.broadcast %cst_12 : f32 to vector<8x50xf32>
    %21 = arith.cmpf ogt, %19, %20 : vector<8x50xf32>
    %cst_13 = arith.constant 0.00999999977 : f32
    %22 = vector.broadcast %cst_13 : f32 to vector<8x50xf32>
    %23 = arith.mulf %22, %19 : vector<8x50xf32>
    %24 = arith.select %21, %19, %23 : vector<8x50xi1>, vector<8x50xf32>
    %c0_14 = arith.constant 0 : index
    %c0_15 = arith.constant 0 : index
    %25 = vector.load %arg6[%c0_14, %c0_15] : memref<1x50xf32, #tpu.memory_space<vmem>>, vector<1x50xf32>
    %26 = vector.broadcast %25 : vector<1x50xf32> to vector<8x50xf32>
    %27 = arith.mulf %24, %26 : vector<8x50xf32>
    %cst_16 = arith.constant dense<0.000000e+00> : vector<8xf32>
    %28 = vector.multi_reduction <add>, %27, %cst_16 [1] : vector<8x50xf32> to vector<8xf32>
    %29 = vector.shape_cast %28 : vector<8xf32> to vector<8x1xf32>
    %c0_17 = arith.constant 0 : index
    %c0_18 = arith.constant 0 : index
    %30 = vector.load %arg7[%c0_17, %c0_18] : memref<1x1xf32, #tpu.memory_space<vmem>>, vector<1x1xf32>
    %31 = vector.broadcast %30 : vector<1x1xf32> to vector<8x1xf32>
    %32 = arith.addf %29, %31 : vector<8x1xf32>
    %c0_19 = arith.constant 0 : index
    %c0_20 = arith.constant 0 : index
    %33 = vector.load %arg8[%c0_19, %c0_20] : memref<8x1xf32, #tpu.memory_space<vmem>>, vector<8x1xf32>
    tpu.vector_store %arg8[%c0_19, %c0_20], %32 {strides = array<i32>} : memref<8x1xf32, #tpu.memory_space<vmem>>, vector<8x1xf32>,
    return
  }
  func.func @transform_0(%arg0: i32) -> (i32, i32) {
    %c0_i32 = arith.constant 0 : i32
    %c0_i32_0 = arith.constant 0 : i32
    return %arg0, %c0_i32 : i32, i32
  }
  func.func @transform_1(%arg0: i32) -> (i32, i32) {
    %c0_i32 = arith.constant 0 : i32
    %c0_i32_0 = arith.constant 0 : i32
    %c0_i32_1 = arith.constant 0 : i32
    return %c0_i32, %c0_i32_0 : i32, i32
  }
  func.func @transform_2(%arg0: i32) -> (i32, i32) {
    %c0_i32 = arith.constant 0 : i32
    %c0_i32_0 = arith.constant 0 : i32
    %c0_i32_1 = arith.constant 0 : i32
    return %c0_i32, %c0_i32_0 : i32, i32
  }
  func.func @transform_3(%arg0: i32) -> (i32, i32) {
    %c0_i32 = arith.constant 0 : i32
    %c0_i32_0 = arith.constant 0 : i32
    %c0_i32_1 = arith.constant 0 : i32
    return %c0_i32, %c0_i32_0 : i32, i32
  }
  func.func @transform_4(%arg0: i32) -> (i32, i32) {
    %c0_i32 = arith.constant 0 : i32
    %c0_i32_0 = arith.constant 0 : i32
    %c0_i32_1 = arith.constant 0 : i32
    return %c0_i32, %c0_i32_0 : i32, i32
  }
  func.func @transform_5(%arg0: i32) -> (i32, i32) {
    %c0_i32 = arith.constant 0 : i32
    %c0_i32_0 = arith.constant 0 : i32
    %c0_i32_1 = arith.constant 0 : i32
    return %c0_i32, %c0_i32_0 : i32, i32
  }
  func.func @transform_6(%arg0: i32) -> (i32, i32) {
    %c0_i32 = arith.constant 0 : i32
    %c0_i32_0 = arith.constant 0 : i32
    %c0_i32_1 = arith.constant 0 : i32
    return %c0_i32, %c0_i32_0 : i32, i32
  }
  func.func @transform_7(%arg0: i32) -> (i32, i32) {
    %c0_i32 = arith.constant 0 : i32
    %c0_i32_0 = arith.constant 0 : i32
    return %arg0, %c0_i32 : i32, i32
  }
}

</mosaic_0001>

<llo_original>
// kernel: tpu_custom_call.1
$region0: #{tpu_custom_call.1}
  #allocation0 [shape = 'u32[]', space=smem, size = 0x4, offset = 0x4, fixed_abs, tag = 'smem constant byte address 0x4 - core index']
  #allocation1 [shape = 'u32[144,128]{1,0:T(1,128)}', space=vmem, size = 0x12000, scoped, tag = 'internal scratch']
  #allocation2 [shape = 'f32[1,1]{1,0:T(1,128)S(1)}', space=vmem, size = 0x200, scoped, tag = 'scoped memory for tpu_custom_call.1']
  %s0 = inlined_call_operand.vmem [shape: f32[8,100], index: 0, kind: input, shape index: {}]
  %s1 = inlined_call_operand.vmem [shape: f32[100,50], index: 1, kind: input, shape index: {}]
  %s2 = inlined_call_operand.vmem [shape: f32[1,50], index: 2, kind: input, shape index: {}]
  %s3 = inlined_call_operand.vmem [shape: f32[50,50], index: 3, kind: input, shape index: {}]
  %s4 = inlined_call_operand.vmem [shape: f32[1,50], index: 4, kind: input, shape index: {}]
  %s5 = inlined_call_operand.vmem [shape: f32[1,50], index: 5, kind: input, shape index: {}]
  %s6 = inlined_call_operand.<no memory space> [shape: f32[1,1], index: 6, kind: input, shape index: {}]
  %s7 = inlined_call_operand.vmem [shape: f32[8,1], index: 7, kind: output, shape index: {}]
  %s8 = sld [smem:[#allocation0]]
  $region38: #{tpu_custom_call.1} parent=0
    _
  %s10 = ssub.s32 1, %s8
  %s11 = scalar_select 0, %s10, %s8
  %v12 = vstv %s6
  %13 = vst [vmem:[#allocation2] sm:$0x1] %v12
  // Predicated region
  $region2: #{tpu_custom_call.1} parent=0 // pred_check
    _
  $region3: #{tpu_custom_call.1} parent=0 // pred_check_branch
    %15 = sbr.rel (0) target = $region5
  $region4: #{tpu_custom_call.1} parent=0 // pred_region
    _
  $region5: #{tpu_custom_call.1} parent=0 // pred_fallthru
    _
  // Predicated region
  $region6: #{tpu_custom_call.1} parent=0 // pred_check
    _
  $region7: #{tpu_custom_call.1} parent=0 // pred_check_branch
    %17 = sbr.rel (0) target = $region9
  $region8: #{tpu_custom_call.1} parent=0 // pred_region
    _
  $region9: #{tpu_custom_call.1} parent=0 // pred_fallthru
    _
  // Predicated region
  $region10: #{tpu_custom_call.1} parent=0 // pred_check
    _
  $region11: #{tpu_custom_call.1} parent=0 // pred_check_branch
    %19 = sbr.rel (0) target = $region13
  $region12: #{tpu_custom_call.1} parent=0 // pred_region
    _
  $region13: #{tpu_custom_call.1} parent=0 // pred_fallthru
    _
  // Predicated region
  $region14: #{tpu_custom_call.1} parent=0 // pred_check
    _
  $region15: #{tpu_custom_call.1} parent=0 // pred_check_branch
    %21 = sbr.rel (0) target = $region17
  $region16: #{tpu_custom_call.1} parent=0 // pred_region
    _
  $region17: #{tpu_custom_call.1} parent=0 // pred_fallthru
    _
  // Predicated region
  $region18: #{tpu_custom_call.1} parent=0 // pred_check
    _
  $region19: #{tpu_custom_call.1} parent=0 // pred_check_branch
    %23 = sbr.rel (0) target = $region21
  $region20: #{tpu_custom_call.1} parent=0 // pred_region
    _
  $region21: #{tpu_custom_call.1} parent=0 // pred_fallthru
    _
  // Predicated region
  $region22: #{tpu_custom_call.1} parent=0 // pred_check
    _
  $region23: #{tpu_custom_call.1} parent=0 // pred_check_branch
    %25 = sbr.rel (0) target = $region25
  $region24: #{tpu_custom_call.1} parent=0 // pred_region
    _
  $region25: #{tpu_custom_call.1} parent=0 // pred_fallthru
    _
  // Predicated region
  $region26: #{tpu_custom_call.1} parent=0 // pred_check
    _
  $region27: #{tpu_custom_call.1} parent=0 // pred_check_branch
    %27 = sbr.rel (0) target = $region29
  $region28: #{tpu_custom_call.1} parent=0 // pred_region
    _
  $region29: #{tpu_custom_call.1} parent=0 // pred_fallthru
    _
  %v29 = vld [vmem:[%s0] sm:$0xff]
  %v30 = vpack.c.bf16 %v29, %v29
  %v31 = vld [vmem:[%s1] sm:$0xff]
  %v32 = vld [vmem:[%s1 + $0x8] sm:$0xff]
  %v33 = vld [vmem:[%s1 + $0x10] sm:$0xff]
  %v34 = vld [vmem:[%s1 + $0x18] sm:$0xff]
  %v35 = vld [vmem:[%s1 + $0x20] sm:$0xff]
  %v36 = vld [vmem:[%s1 + $0x28] sm:$0xff]
  %v37 = vld [vmem:[%s1 + $0x30] sm:$0xff]
  %v38 = vld [vmem:[%s1 + $0x38] sm:$0xff]
  %v39 = vld [vmem:[%s1 + $0x40] sm:$0xff]
  %v40 = vld [vmem:[%s1 + $0x48] sm:$0xff]
  %v41 = vld [vmem:[%s1 + $0x50] sm:$0xff]
  %v42 = vld [vmem:[%s1 + $0x58] sm:$0xff]
  %v43 = vld [vmem:[%s1 + $0x60] sm:$0xf]
  %v44 = vpack.c.bf16 %v32, %v31
  %v45 = vpack.c.bf16 %v34, %v33
  %v46 = vpack.c.bf16 %v36, %v35
  %v47 = vpack.c.bf16 %v38, %v37
  %v48 = vpack.c.bf16 %v40, %v39
  %v49 = vpack.c.bf16 %v42, %v41
  %v50 = vpack.c.bf16 %v43, %v43
  %v51 = vld [vmem:[%s2] sm:$0x1]
  %v53 = vlaneseq
  %v54 = vshrl.u32 %v53, 7
  %v55 = vsub.s32 0, %v54
  %v56 = vrot.slane %v51, %v55
  %vm58 = vcmask 818176
  %v60 = vsel %vm58, %v30, 0
  %vm62 = vcmask 1041408
  %v64 = vsel %vm62, %v50, 0
  %66 = vmatprep.subr.bf16.mxu0 0
  %67 = vmatpush1.bf16.msra.mxu0 %v44
  %68 = vmatprep.subr.bf16.mxu0 0
  %69 = vmatpush1.bf16.msra.mxu0 %v45
  %70 = vmatprep.subr.bf16.mxu0 0
  %71 = vmatpush1.bf16.msra.mxu0 %v46
  %72 = vmatprep.subr.bf16.mxu0 0
  %73 = vmatpush1.bf16.msra.mxu0 %v47
  %74 = vmatprep.subr.bf16.mxu0 0
  %75 = vmatpush1.bf16.msra.mxu0 %v48
  %76 = vmatprep.subr.bf16.mxu0 0
  %77 = vmatpush1.bf16.msra.mxu0 %v49
  %78 = vmatprep.subr.bf16.mxu0 0
  %79 = vmatpush1.bf16.msra.mxu0 %v64
  %80 = vmatprep.subr.bf16.mxu0 0
  %81 = vmatpush1.bf16.msra.mxu0 0
  %82 = vmatprep.subr.bf16.mxu0 0
  %83 = vmatpush1.bf16.msra.mxu0 0
  %84 = vmatprep.subr.bf16.mxu0 0
  %85 = vmatpush1.bf16.msra.mxu0 0
  %86 = vmatprep.subr.bf16.mxu0 0
  %87 = vmatpush1.bf16.msra.mxu0 0
  %88 = vmatprep.subr.bf16.mxu0 0
  %89 = vmatpush1.bf16.msra.mxu0 0
  %90 = vmatprep.subr.bf16.mxu0 0
  %91 = vmatpush1.bf16.msra.mxu0 0
  %92 = vmatprep.subr.bf16.mxu0 0
  %93 = vmatpush1.bf16.msra.mxu0 0
  %94 = vmatprep.subr.bf16.mxu0 0
  %95 = vmatpush1.bf16.msra.mxu0 0
  %96 = vmatprep.subr.bf16.mxu0 0
  %97 = vmatpush1.bf16.msra.mxu0 0
  %98 = vmatprep.mubr.bf16.mxu0 0
  %99 = vmatmul.mubr.bf16.gmra.mrb[0].mxu0 %v60
  %v100 = vpop.f32.mrb[0].mxu0
  %v101 = vadd.f32 %v56, %v100
  %v102 = vpop.f32.mrb[0].mxu0
  %v103 = vpop.f32.mrb[0].mxu0
  %v104 = vpop.f32.mrb[0].mxu0
  %105 = vdwg.mxu0
  %vm106 = vcmp.gt.f32.partialorder %v101, 0.0
  %v107 = vmul.f32 %v101, 0.01
  %v108 = vsel %vm106, %v101, %v107
  %v109 = vpack.c.bf16 %v108, %v108
  %v110 = vld [vmem:[%s3] sm:$0xff]
  %v111 = vld [vmem:[%s3 + $0x8] sm:$0xff]
  %v112 = vld [vmem:[%s3 + $0x10] sm:$0xff]
  %v113 = vld [vmem:[%s3 + $0x18] sm:$0xff]
  %v114 = vld [vmem:[%s3 + $0x20] sm:$0xff]
  %v115 = vld [vmem:[%s3 + $0x28] sm:$0xff]
  %v116 = vld [vmem:[%s3 + $0x30] sm:$0x3]
  %v117 = vpack.c.bf16 %v111, %v110
  %v118 = vpack.c.bf16 %v113, %v112
  %v119 = vpack.c.bf16 %v115, %v114
  %v120 = vpack.c.bf16 %v116, %v116
  %v121 = vld [vmem:[%s4] sm:$0x1]
  %v123 = vlaneseq
  %v124 = vshrl.u32 %v123, 7
  %v125 = vsub.s32 0, %v124
  %v126 = vrot.slane %v121, %v125
  %vm128 = vcmask 408576
  %v130 = vsel %vm128, %v109, 0
  %vm132 = vcmask 1040384
  %v134 = vsel %vm132, %v120, 0
  %136 = vmatprep.subr.bf16.mxu0 0
  %137 = vmatpush1.bf16.msra.mxu0 %v117
  %138 = vmatprep.subr.bf16.mxu0 0
  %139 = vmatpush1.bf16.msra.mxu0 %v118
  %140 = vmatprep.subr.bf16.mxu0 0
  %141 = vmatpush1.bf16.msra.mxu0 %v119
  %142 = vmatprep.subr.bf16.mxu0 0
  %143 = vmatpush1.bf16.msra.mxu0 %v134
  %144 = vmatprep.subr.bf16.mxu0 0
  %145 = vmatpush1.bf16.msra.mxu0 0
  %146 = vmatprep.subr.bf16.mxu0 0
  %147 = vmatpush1.bf16.msra.mxu0 0
  %148 = vmatprep.subr.bf16.mxu0 0
  %149 = vmatpush1.bf16.msra.mxu0 0
  %150 = vmatprep.subr.bf16.mxu0 0
  %151 = vmatpush1.bf16.msra.mxu0 0
  %152 = vmatprep.subr.bf16.mxu0 0
  %153 = vmatpush1.bf16.msra.mxu0 0
  %154 = vmatprep.subr.bf16.mxu0 0
  %155 = vmatpush1.bf16.msra.mxu0 0
  %156 = vmatprep.subr.bf16.mxu0 0
  %157 = vmatpush1.bf16.msra.mxu0 0
  %158 = vmatprep.subr.bf16.mxu0 0
  %159 = vmatpush1.bf16.msra.mxu0 0
  %160 = vmatprep.subr.bf16.mxu0 0
  %161 = vmatpush1.bf16.msra.mxu0 0
  %162 = vmatprep.subr.bf16.mxu0 0
  %163 = vmatpush1.bf16.msra.mxu0 0
  %164 = vmatprep.subr.bf16.mxu0 0
  %165 = vmatpush1.bf16.msra.mxu0 0
  %166 = vmatprep.subr.bf16.mxu0 0
  %167 = vmatpush1.bf16.msra.mxu0 0
  %168 = vmatprep.mubr.bf16.mxu0 0
  %169 = vmatmul.mubr.bf16.gmra.mrb[0].mxu0 %v130
  %v170 = vpop.f32.mrb[0].mxu0
  %v171 = vadd.f32 %v126, %v170
  %v172 = vpop.f32.mrb[0].mxu0
  %v173 = vpop.f32.mrb[0].mxu0
  %v174 = vpop.f32.mrb[0].mxu0
  %175 = vdwg.mxu0
  %vm176 = vcmp.gt.f32.partialorder %v171, 0.0
  %v177 = vmul.f32 %v171, 0.01
  %v178 = vsel %vm176, %v171, %v177
  %v179 = vld [vmem:[%s5] sm:$0x1]
  %v181 = vlaneseq
  %v182 = vshrl.u32 %v181, 7
  %v183 = vsub.s32 0, %v182
  %v184 = vrot.slane %v179, %v183
  %v186 = vmul.f32 %v178, %v184
  %v187 = vsel %vm128, %v186, 0.0
  %188 = vadd.xlane.f32.xlu0 %v187
  %v189 = vpop.xlane.xlu0 %188
  %v190 = vld [vmem:[#allocation2] sm:$0x1]
  %v192 = vlaneseq
  %v193 = vshrl.u32 %v192, 7
  %v194 = vsub.s32 0, %v193
  %v195 = vrot.slane %v190, %v194
  %v197 = vadd.f32 %v189, %v195
  %vm198 = vcmask 7168
  %199 = vst.msk [vmem:[%s7] sm:$0xff] %vm198, %v197
  // Predicated region
  $region30: #{tpu_custom_call.1} parent=0 // pred_check
    _
  $region31: #{tpu_custom_call.1} parent=0 // pred_check_branch
    %201 = sbr.rel (0) target = $region33
  $region32: #{tpu_custom_call.1} parent=0 // pred_region
    _
  $region33: #{tpu_custom_call.1} parent=0 // pred_fallthru
    _
  // Predicated region
  $region34: #{tpu_custom_call.1} parent=0 // pred_check
    _
  $region35: #{tpu_custom_call.1} parent=0 // pred_check_branch
    %203 = sbr.rel (0) target = $region37
  $region36: #{tpu_custom_call.1} parent=0 // pred_region
    _
  $region37: #{tpu_custom_call.1} parent=0 // pred_fallthru
    _

</llo_original>
